<compile_context>
chip_gen: v5e
topology: v5e:2x2
jax: 0.10.0
libtpu: 0.0.40
codegen_flags: <defaults>
</compile_context>

<pallas_src>
import jax
import jax.numpy as jnp
from jax import lax
from jax.experimental import pallas as pl
from jax.experimental.pallas import tpu as pltpu


def _round_up(x, m):
    return (x + m - 1) // m * m


# lhs[m, k] x rhs[n, k] -> [m, n]   (rhs transposed, same pattern as q @ k^T)
_NT_DIM_NUMBERS = (((1,), (1,)), ((), ()))


def _make_kernel(compute_dtype, transpose_out):
    def kernel(x_ref, w1_ref, b1_ref, w2_ref, b2_ref, w3_ref, b3_ref, o_ref):
        x = x_ref[...]
        if x.dtype != compute_dtype:
            x = x.astype(compute_dtype)
        # Layer 0: Linear + ReLU (f32 MXU accumulation, f32 elementwise)
        h = jnp.dot(x, w1_ref[...], preferred_element_type=jnp.float32) + b1_ref[...]
        h = jnp.maximum(h, 0.0)
        # Layer 1: Linear + ReLU
        h = jnp.dot(h.astype(compute_dtype), w2_ref[...],
                    preferred_element_type=jnp.float32) + b2_ref[...]
        h = jnp.maximum(h, 0.0)
        h = h.astype(compute_dtype)
        # Final readout Linear (no activation, matches MLPReadout.forward).
        if transpose_out:
            # w3 arrives pre-transposed as [C_pad, d2]; NT contraction on d2
            # yields the result already laid out [C_pad, tile_n] -- batch on the
            # lane axis, no explicit in-kernel transpose needed.
            y = lax.dot_general(w3_ref[...], h, _NT_DIM_NUMBERS,
                                preferred_element_type=jnp.float32) + b3_ref[...]
        else:
            y = jnp.dot(h, w3_ref[...],
                        preferred_element_type=jnp.float32) + b3_ref[...]
        o_ref[...] = y.astype(o_ref.dtype)

    return kernel


def mlp_readout_forward(x, params, *, tile_n=1024, matmul_dtype=jnp.float32):
    """x: [N, F]; params = [(w1,b1),(w2,b2),(w3,b3)] with w: [in,out], b: [1,out]."""
    (w1, b1), (w2, b2), (w3, b3) = params
    n, f = x.shape
    d1 = w1.shape[1]
    d2 = w2.shape[1]
    c = w3.shape[1]

    # For small C emit a transposed output block: pad C only to 8 sublanes
    # (zero columns -- exact, sliced off after the call).
    transpose_out = (c % 128) != 0
    if transpose_out:
        c_pad = _round_up(c, 8)
        w3 = jnp.pad(w3, ((0, 0), (0, c_pad - c))).T          # [c_pad, d2]
        b3 = jnp.pad(b3, ((0, 0), (0, c_pad - c))).T          # [c_pad, 1]
    else:
        c_pad = c

    # Cast only the (tiny, amortizable) weights.  x is never re-materialized in
    # a different dtype here -- hand in bf16 x from the producer if you want
    # halved x HBM traffic.
    if jnp.dtype(matmul_dtype) != jnp.dtype(jnp.float32):
        w1 = w1.astype(matmul_dtype)
        w2 = w2.astype(matmul_dtype)
        w3 = w3.astype(matmul_dtype)

    # Batch tiling: tile_n multiple of 8 (sublane constraint); pad N so the grid
    # divides evenly (padded rows are zeros, sliced off afterwards).
    tile_n = max(8, min(_round_up(n, 8), _round_up(tile_n, 8)))
    n_pad = _round_up(n, tile_n)
    if n_pad != n:
        x = jnp.pad(x, ((0, n_pad - n), (0, 0)))
    grid = (n_pad // tile_n,)

    # Explicit VMEM budget (scoped defaults are ~16 MiB v5e / ~32 MiB v6e,v7x):
    # double-buffered x/out tiles + weights (assume 2 weight buffers so the
    # fallback path also fits), 2x headroom, capped at 64 MiB (v7x physical).
    x_item = jnp.dtype(x.dtype).itemsize
    w_item = jnp.dtype(w1.dtype).itemsize
    w_elems = f * d1 + d1 * d2 + d2 * c_pad
    b_elems = d1 + d2 + c_pad
    tile_bytes = 2 * tile_n * f * x_item + 2 * tile_n * c_pad * 4
    weight_bytes = 2 * (w_elems * w_item + b_elems * 4)
    vmem_limit = int(min(max(2 * (tile_bytes + weight_bytes) + (2 << 20), 32 << 20),
                         64 << 20))

    kernel = _make_kernel(jnp.dtype(matmul_dtype), transpose_out)
    x_spec = pl.BlockSpec((tile_n, f), lambda i: (i, 0))
    if transpose_out:
        out_shape = jax.ShapeDtypeStruct((c_pad, n_pad), jnp.float32)
        out_spec = pl.BlockSpec((c_pad, tile_n), lambda i: (0, i))
    else:
        out_shape = jax.ShapeDtypeStruct((n_pad, c_pad), jnp.float32)
        out_spec = pl.BlockSpec((tile_n, c_pad), lambda i: (i, 0))

    def call(single_buffer_weights):
        kwargs = {}
        if single_buffer_weights:
            kwargs = dict(pipeline_mode=pl.Buffered(1))

        def resident(shape):
            # Constant index_map: fetched once, stays VMEM-resident.
            return pl.BlockSpec(shape, lambda i: (0, 0), **kwargs)

        return pl.pallas_call(
            kernel,
            out_shape=out_shape,
            grid=grid,
            in_specs=[
                x_spec,
                resident(w1.shape), resident(b1.shape),
                resident(w2.shape), resident(b2.shape),
                resident(w3.shape), resident(b3.shape),
            ],
            out_specs=out_spec,
            compiler_params=pltpu.CompilerParams(
                dimension_semantics=("parallel",),
                vmem_limit_bytes=vmem_limit),
        )(x, w1, b1, w2, b2, w3, b3)

    try:
        # Single-buffer the resident weight/bias blocks (constant index_map
        # never re-fetches, so one buffer suffices).
        out = call(True)
    except Exception:
        # Lowering rejected pl.Buffered(1): fall back to default buffering.
        out = call(False)

    if transpose_out:
        return out[:c, :n].T
    return out[:n, :c]


def mlp_readout_ref(x, params):
    """Pure-JAX reference matching MLPReadout.forward (L=2)."""
    (w1, b1), (w2, b2), (w3, b3) = params
    y = jnp.maximum(x @ w1 + b1, 0.0)
    y = jnp.maximum(y @ w2 + b2, 0.0)
    return y @ w3 + b3


def init_mlp_readout_params(key, input_dim, output_dim, L=2):
    """Mimics torch.nn.Linear default init (+/- 1/sqrt(fan_in)); weights stored [in, out]."""
    dims = [input_dim // (2 ** l) for l in range(L + 1)] + [output_dim]
    params = []
    for l in range(L + 1):
        fan_in, fan_out = dims[l], dims[l + 1]
        key, kw, kb = jax.random.split(key, 3)
        bound = 1.0 / jnp.sqrt(fan_in)
        w = jax.random.uniform(kw, (fan_in, fan_out), jnp.float32, -bound, bound)
        b = jax.random.uniform(kb, (1, fan_out), jnp.float32, -bound, bound)
        params.append((w, b))
    return params


if __name__ == "__main__":
    key = jax.random.PRNGKey(0)
    kx1, kp1, kx2, kp2 = jax.random.split(key, 4)

    # Test 1: small graph-readout shape (single batch tile, transposed output path).
    batch, input_dim, output_dim = 8, 32, 4       # hidden dims: 16, 8
    x = jax.random.normal(kx1, (batch, input_dim), dtype=jnp.float32)
    params = init_mlp_readout_params(kp1, input_dim, output_dim)

    out = jax.block_until_ready(mlp_readout_forward(x, params))
    ref = mlp_readout_ref(x, params)
    assert out.shape == (batch, output_dim)
    assert jnp.allclose(out, ref, atol=1e-4, rtol=1e-4)

    # Test 2: batch not a multiple of the tile -> exercises the pipelined grid,
    # batch padding, and the sublane-padded transposed output.
    batch2, input_dim2, output_dim2 = 300, 64, 6  # hidden dims: 32, 16
    x2 = jax.random.normal(kx2, (batch2, input_dim2), dtype=jnp.float32)
    params2 = init_mlp_readout_params(kp2, input_dim2, output_dim2)

    out2 = jax.block_until_ready(mlp_readout_forward(x2, params2, tile_n=128))
    ref2 = mlp_readout_ref(x2, params2)
    assert out2.shape == (batch2, output_dim2)
    assert jnp.allclose(out2, ref2, atol=1e-4, rtol=1e-4)

    # Test 3: bf16 weight path (valid on v5e/v6e/v7x MXUs); looser tolerance
    # because operand precision drops relative to the f32 torch reference.
    out3 = jax.block_until_ready(
        mlp_readout_forward(x2, params2, tile_n=128, matmul_dtype=jnp.bfloat16))
    assert out3.shape == (batch2, output_dim2)
    assert jnp.allclose(out3, ref2, atol=1e-1, rtol=1e-1)

    print("KERNEL_OK")
</pallas_src>

<mosaic_0001>
module attributes {stable_mosaic.version = 11 : i64} {
  func.func @kernel(%arg0: i32, %arg1: memref<8x32xf32, #tpu.memory_space<vmem>>, %arg2: memref<32x16xf32, #tpu.memory_space<vmem>>, %arg3: memref<1x16xf32, #tpu.memory_space<vmem>>, %arg4: memref<16x8xf32, #tpu.memory_space<vmem>>, %arg5: memref<1x8xf32, #tpu.memory_space<vmem>>, %arg6: memref<8x8xf32, #tpu.memory_space<vmem>>, %arg7: memref<8x1xf32, #tpu.memory_space<vmem>>, %arg8: memref<8x8xf32, #tpu.memory_space<vmem>>) attributes {dimension_semantics = [#tpu.dimension_semantics<parallel>], iteration_bounds = array<i64: 1>, scalar_prefetch = 0 : i64, scratch_operands = 0 : i64, tpu.core_type = #tpu.core_type<tc>, window_params = [{transform_indices = @transform_0, window_bounds = array<i64: 8, 32>}, {pipeline_mode = #tpu.pipeline_mode<synchronous>, transform_indices = @transform_1, window_bounds = array<i64: 32, 16>}, {pipeline_mode = #tpu.pipeline_mode<synchronous>, transform_indices = @transform_2, window_bounds = array<i64: 1, 16>}, {pipeline_mode = #tpu.pipeline_mode<synchronous>, transform_indices = @transform_3, window_bounds = array<i64: 16, 8>}, {pipeline_mode = #tpu.pipeline_mode<synchronous>, transform_indices = @transform_4, window_bounds = array<i64: 1, 8>}, {pipeline_mode = #tpu.pipeline_mode<synchronous>, transform_indices = @transform_5, window_bounds = array<i64: 8, 8>}, {pipeline_mode = #tpu.pipeline_mode<synchronous>, transform_indices = @transform_6, window_bounds = array<i64: 8, 1>}, {transform_indices = @transform_7, window_bounds = array<i64: 8, 8>}]} {
    %c0 = arith.constant 0 : index
    %c0_0 = arith.constant 0 : index
    %0 = vector.load %arg1[%c0, %c0_0] : memref<8x32xf32, #tpu.memory_space<vmem>>, vector<8x32xf32>
    %c0_1 = arith.constant 0 : index
    %c0_2 = arith.constant 0 : index
    %1 = vector.load %arg2[%c0_1, %c0_2] : memref<32x16xf32, #tpu.memory_space<vmem>>, vector<32x16xf32>
    %cst = arith.constant dense<0.000000e+00> : vector<8x16xf32>
    %2 = tpu.matmul %0, %1, %cst {dimension_numbers = #tpu.dot_dimension_numbers<[1], [0], [0], [1], [0, 0, 1, 1], [], []>} : vector<8x32xf32>, vector<32x16xf32>, vector<8x16xf32> -> vector<8x16xf32>
    %c0_3 = arith.constant 0 : index
    %c0_4 = arith.constant 0 : index
    %3 = vector.load %arg3[%c0_3, %c0_4] : memref<1x16xf32, #tpu.memory_space<vmem>>, vector<1x16xf32>
    %4 = vector.broadcast %3 : vector<1x16xf32> to vector<8x16xf32>
    %5 = arith.addf %2, %4 : vector<8x16xf32>
    %cst_5 = arith.constant 0.000000e+00 : f32
    %6 = vector.broadcast %cst_5 : f32 to vector<8x16xf32>
    %7 = arith.maximumf %5, %6 : vector<8x16xf32>
    %c0_6 = arith.constant 0 : index
    %c0_7 = arith.constant 0 : index
    %8 = vector.load %arg4[%c0_6, %c0_7] : memref<16x8xf32, #tpu.memory_space<vmem>>, vector<16x8xf32>
    %cst_8 = arith.constant dense<0.000000e+00> : vector<8x8xf32>
    %9 = tpu.matmul %7, %8, %cst_8 {dimension_numbers = #tpu.dot_dimension_numbers<[1], [0], [0], [1], [0, 0, 1, 1], [], []>} : vector<8x16xf32>, vector<16x8xf32>, vector<8x8xf32> -> vector<8x8xf32>
    %c0_9 = arith.constant 0 : index
    %c0_10 = arith.constant 0 : index
    %10 = vector.load %arg5[%c0_9, %c0_10] : memref<1x8xf32, #tpu.memory_space<vmem>>, vector<1x8xf32>
    %11 = vector.broadcast %10 : vector<1x8xf32> to vector<8x8xf32>
    %12 = arith.addf %9, %11 : vector<8x8xf32>
    %cst_11 = arith.constant 0.000000e+00 : f32
    %13 = vector.broadcast %cst_11 : f32 to vector<8x8xf32>
    %14 = arith.maximumf %12, %13 : vector<8x8xf32>
    %c0_12 = arith.constant 0 : index
    %c0_13 = arith.constant 0 : index
    %15 = vector.load %arg6[%c0_12, %c0_13] : memref<8x8xf32, #tpu.memory_space<vmem>>, vector<8x8xf32>
    %cst_14 = arith.constant dense<0.000000e+00> : vector<8x8xf32>
    %16 = tpu.matmul %15, %14, %cst_14 {dimension_numbers = #tpu.dot_dimension_numbers<[1], [1], [0], [0], [0, 0, 1, 0], [], []>} : vector<8x8xf32>, vector<8x8xf32>, vector<8x8xf32> -> vector<8x8xf32>
    %c0_15 = arith.constant 0 : index
    %c0_16 = arith.constant 0 : index
    %17 = vector.load %arg7[%c0_15, %c0_16] : memref<8x1xf32, #tpu.memory_space<vmem>>, vector<8x1xf32>
    %18 = vector.broadcast %17 : vector<8x1xf32> to vector<8x8xf32>
    %19 = arith.addf %16, %18 : vector<8x8xf32>
    %c0_17 = arith.constant 0 : index
    %c0_18 = arith.constant 0 : index
    %20 = vector.load %arg8[%c0_17, %c0_18] : memref<8x8xf32, #tpu.memory_space<vmem>>, vector<8x8xf32>
    tpu.vector_store %arg8[%c0_17, %c0_18], %19 {strides = array<i32>} : memref<8x8xf32, #tpu.memory_space<vmem>>, vector<8x8xf32>,
    return
  }
  func.func @transform_0(%arg0: i32) -> (i32, i32) {
    %c0_i32 = arith.constant 0 : i32
    %c0_i32_0 = arith.constant 0 : i32
    return %arg0, %c0_i32 : i32, i32
  }
  func.func @transform_1(%arg0: i32) -> (i32, i32) {
    %c0_i32 = arith.constant 0 : i32
    %c0_i32_0 = arith.constant 0 : i32
    %c0_i32_1 = arith.constant 0 : i32
    return %c0_i32, %c0_i32_0 : i32, i32
  }
  func.func @transform_2(%arg0: i32) -> (i32, i32) {
    %c0_i32 = arith.constant 0 : i32
    %c0_i32_0 = arith.constant 0 : i32
    %c0_i32_1 = arith.constant 0 : i32
    return %c0_i32, %c0_i32_0 : i32, i32
  }
  func.func @transform_3(%arg0: i32) -> (i32, i32) {
    %c0_i32 = arith.constant 0 : i32
    %c0_i32_0 = arith.constant 0 : i32
    %c0_i32_1 = arith.constant 0 : i32
    return %c0_i32, %c0_i32_0 : i32, i32
  }
  func.func @transform_4(%arg0: i32) -> (i32, i32) {
    %c0_i32 = arith.constant 0 : i32
    %c0_i32_0 = arith.constant 0 : i32
    %c0_i32_1 = arith.constant 0 : i32
    return %c0_i32, %c0_i32_0 : i32, i32
  }
  func.func @transform_5(%arg0: i32) -> (i32, i32) {
    %c0_i32 = arith.constant 0 : i32
    %c0_i32_0 = arith.constant 0 : i32
    %c0_i32_1 = arith.constant 0 : i32
    return %c0_i32, %c0_i32_0 : i32, i32
  }
  func.func @transform_6(%arg0: i32) -> (i32, i32) {
    %c0_i32 = arith.constant 0 : i32
    %c0_i32_0 = arith.constant 0 : i32
    %c0_i32_1 = arith.constant 0 : i32
    return %c0_i32, %c0_i32_0 : i32, i32
  }
  func.func @transform_7(%arg0: i32) -> (i32, i32) {
    %c0_i32 = arith.constant 0 : i32
    %c0_i32_0 = arith.constant 0 : i32
    return %c0_i32, %arg0 : i32, i32
  }
}

module attributes {stable_mosaic.version = 11 : i64} {
  func.func @kernel(%arg0: i32, %arg1: memref<8x32xf32, #tpu.memory_space<vmem>>, %arg2: memref<32x16xf32, #tpu.memory_space<vmem>>, %arg3: memref<1x16xf32, #tpu.memory_space<vmem>>, %arg4: memref<16x8xf32, #tpu.memory_space<vmem>>, %arg5: memref<1x8xf32, #tpu.memory_space<vmem>>, %arg6: memref<8x8xf32, #tpu.memory_space<vmem>>, %arg7: memref<8x1xf32, #tpu.memory_space<vmem>>, %arg8: memref<8x8xf32, #tpu.memory_space<vmem>>) attributes {dimension_semantics = [#tpu.dimension_semantics<parallel>], iteration_bounds = array<i64: 1>, scalar_prefetch = 0 : i64, scratch_operands = 0 : i64, tpu.core_type = #tpu.core_type<tc>, window_params = [{transform_indices = @transform_0, window_bounds = array<i64: 8, 32>}, {pipeline_mode = #tpu.pipeline_mode<synchronous>, transform_indices = @transform_1, window_bounds = array<i64: 32, 16>}, {pipeline_mode = #tpu.pipeline_mode<synchronous>, transform_indices = @transform_2, window_bounds = array<i64: 1, 16>}, {pipeline_mode = #tpu.pipeline_mode<synchronous>, transform_indices = @transform_3, window_bounds = array<i64: 16, 8>}, {pipeline_mode = #tpu.pipeline_mode<synchronous>, transform_indices = @transform_4, window_bounds = array<i64: 1, 8>}, {pipeline_mode = #tpu.pipeline_mode<synchronous>, transform_indices = @transform_5, window_bounds = array<i64: 8, 8>}, {pipeline_mode = #tpu.pipeline_mode<synchronous>, transform_indices = @transform_6, window_bounds = array<i64: 8, 1>}, {transform_indices = @transform_7, window_bounds = array<i64: 8, 8>}]} {
    %c0 = arith.constant 0 : index
    %c0_0 = arith.constant 0 : index
    %0 = vector.load %arg1[%c0, %c0_0] : memref<8x32xf32, #tpu.memory_space<vmem>>, vector<8x32xf32>
    %c0_1 = arith.constant 0 : index
    %c0_2 = arith.constant 0 : index
    %1 = vector.load %arg2[%c0_1, %c0_2] : memref<32x16xf32, #tpu.memory_space<vmem>>, vector<32x16xf32>
    %cst = arith.constant dense<0.000000e+00> : vector<8x16xf32>
    %2 = tpu.matmul %0, %1, %cst {dimension_numbers = #tpu.dot_dimension_numbers<[1], [0], [0], [1], [0, 0, 1, 1], [], []>} : vector<8x32xf32>, vector<32x16xf32>, vector<8x16xf32> -> vector<8x16xf32>
    %c0_3 = arith.constant 0 : index
    %c0_4 = arith.constant 0 : index
    %3 = vector.load %arg3[%c0_3, %c0_4] : memref<1x16xf32, #tpu.memory_space<vmem>>, vector<1x16xf32>
    %4 = vector.broadcast %3 : vector<1x16xf32> to vector<8x16xf32>
    %5 = arith.addf %2, %4 : vector<8x16xf32>
    %cst_5 = arith.constant 0.000000e+00 : f32
    %6 = vector.broadcast %cst_5 : f32 to vector<8x16xf32>
    %7 = arith.maximumf %5, %6 : vector<8x16xf32>
    %c0_6 = arith.constant 0 : index
    %c0_7 = arith.constant 0 : index
    %8 = vector.load %arg4[%c0_6, %c0_7] : memref<16x8xf32, #tpu.memory_space<vmem>>, vector<16x8xf32>
    %cst_8 = arith.constant dense<0.000000e+00> : vector<8x8xf32>
    %9 = tpu.matmul %7, %8, %cst_8 {dimension_numbers = #tpu.dot_dimension_numbers<[1], [0], [0], [1], [0, 0, 1, 1], [], []>} : vector<8x16xf32>, vector<16x8xf32>, vector<8x8xf32> -> vector<8x8xf32>
    %c0_9 = arith.constant 0 : index
    %c0_10 = arith.constant 0 : index
    %10 = vector.load %arg5[%c0_9, %c0_10] : memref<1x8xf32, #tpu.memory_space<vmem>>, vector<1x8xf32>
    %11 = vector.broadcast %10 : vector<1x8xf32> to vector<8x8xf32>
    %12 = arith.addf %9, %11 : vector<8x8xf32>
    %cst_11 = arith.constant 0.000000e+00 : f32
    %13 = vector.broadcast %cst_11 : f32 to vector<8x8xf32>
    %14 = arith.maximumf %12, %13 : vector<8x8xf32>
    %c0_12 = arith.constant 0 : index
    %c0_13 = arith.constant 0 : index
    %15 = vector.load %arg6[%c0_12, %c0_13] : memref<8x8xf32, #tpu.memory_space<vmem>>, vector<8x8xf32>
    %cst_14 = arith.constant dense<0.000000e+00> : vector<8x8xf32>
    %16 = tpu.matmul %15, %14, %cst_14 {dimension_numbers = #tpu.dot_dimension_numbers<[1], [1], [0], [0], [0, 0, 1, 0], [], []>} : vector<8x8xf32>, vector<8x8xf32>, vector<8x8xf32> -> vector<8x8xf32>
    %c0_15 = arith.constant 0 : index
    %c0_16 = arith.constant 0 : index
    %17 = vector.load %arg7[%c0_15, %c0_16] : memref<8x1xf32, #tpu.memory_space<vmem>>, vector<8x1xf32>
    %18 = vector.broadcast %17 : vector<8x1xf32> to vector<8x8xf32>
    %19 = arith.addf %16, %18 : vector<8x8xf32>
    %c0_17 = arith.constant 0 : index
    %c0_18 = arith.constant 0 : index
    %20 = vector.load %arg8[%c0_17, %c0_18] : memref<8x8xf32, #tpu.memory_space<vmem>>, vector<8x8xf32>
    tpu.vector_store %arg8[%c0_17, %c0_18], %19 {strides = array<i32>} : memref<8x8xf32, #tpu.memory_space<vmem>>, vector<8x8xf32>,
    return
  }
  func.func @transform_0(%arg0: i32) -> (i32, i32) {
    %c0_i32 = arith.constant 0 : i32
    %c0_i32_0 = arith.constant 0 : i32
    return %arg0, %c0_i32 : i32, i32
  }
  func.func @transform_1(%arg0: i32) -> (i32, i32) {
    %c0_i32 = arith.constant 0 : i32
    %c0_i32_0 = arith.constant 0 : i32
    %c0_i32_1 = arith.constant 0 : i32
    return %c0_i32, %c0_i32_0 : i32, i32
  }
  func.func @transform_2(%arg0: i32) -> (i32, i32) {
    %c0_i32 = arith.constant 0 : i32
    %c0_i32_0 = arith.constant 0 : i32
    %c0_i32_1 = arith.constant 0 : i32
    return %c0_i32, %c0_i32_0 : i32, i32
  }
  func.func @transform_3(%arg0: i32) -> (i32, i32) {
    %c0_i32 = arith.constant 0 : i32
    %c0_i32_0 = arith.constant 0 : i32
    %c0_i32_1 = arith.constant 0 : i32
    return %c0_i32, %c0_i32_0 : i32, i32
  }
  func.func @transform_4(%arg0: i32) -> (i32, i32) {
    %c0_i32 = arith.constant 0 : i32
    %c0_i32_0 = arith.constant 0 : i32
    %c0_i32_1 = arith.constant 0 : i32
    return %c0_i32, %c0_i32_0 : i32, i32
  }
  func.func @transform_5(%arg0: i32) -> (i32, i32) {
    %c0_i32 = arith.constant 0 : i32
    %c0_i32_0 = arith.constant 0 : i32
    %c0_i32_1 = arith.constant 0 : i32
    return %c0_i32, %c0_i32_0 : i32, i32
  }
  func.func @transform_6(%arg0: i32) -> (i32, i32) {
    %c0_i32 = arith.constant 0 : i32
    %c0_i32_0 = arith.constant 0 : i32
    %c0_i32_1 = arith.constant 0 : i32
    return %c0_i32, %c0_i32_0 : i32, i32
  }
  func.func @transform_7(%arg0: i32) -> (i32, i32) {
    %c0_i32 = arith.constant 0 : i32
    %c0_i32_0 = arith.constant 0 : i32
    return %c0_i32, %arg0 : i32, i32
  }
}

</mosaic_0001>

<llo_original>
// kernel: tpu_custom_call.1
$region0: #{tpu_custom_call.1}
  #allocation0 [shape = 'u32[]', space=smem, size = 0x4, offset = 0x4, fixed_abs, tag = 'smem constant byte address 0x4 - core index']
  #allocation1 [shape = 'u32[72,128]{1,0:T(1,128)}', space=vmem, size = 0x9000, scoped, tag = 'internal scratch']
  %s0 = inlined_call_operand.vmem [shape: f32[8,32], index: 0, kind: input, shape index: {}]
  %s1 = inlined_call_operand.vmem [shape: f32[32,16], index: 1, kind: input, shape index: {}]
  %s2 = inlined_call_operand.vmem [shape: f32[1,16], index: 2, kind: input, shape index: {}]
  %s3 = inlined_call_operand.vmem [shape: f32[16,8], index: 3, kind: input, shape index: {}]
  %s4 = inlined_call_operand.vmem [shape: f32[1,8], index: 4, kind: input, shape index: {}]
  %s5 = inlined_call_operand.vmem [shape: f32[8,8], index: 5, kind: input, shape index: {}]
  %s6 = inlined_call_operand.vmem [shape: f32[8,1], index: 6, kind: input, shape index: {}]
  %s7 = inlined_call_operand.hbm [shape: f32[8,8], index: 7, kind: output, shape index: {}]
  %s8 = sld [smem:[#allocation0]]
  $region38: #{tpu_custom_call.1} parent=0
    _
  %s10 = ssub.s32 1, %s8
  %s11 = scalar_select 0, %s10, %s8
  $region1: #{tpu_custom_call.1} parent=0
    #allocation2 [shape = 'u8[4096]{0}', space=vmem, size = 0x1000, scoped, tag = 'output window, operand 0, single buffered']
    #allocation3 [shape = 's32[1]{0}', space=sflag, size = 0x4, scoped, tag = 'scoped memory for tpu_custom_call.1']
    %12 = vsyncpa [#allocation3], 0
    // Predicated region
    $region2: #{tpu_custom_call.1} parent=1 // pred_check
      _
    $region3: #{tpu_custom_call.1} parent=1 // pred_check_branch
      %14 = sbr.rel (0) target = $region5
    $region4: #{tpu_custom_call.1} parent=1 // pred_region
      _
    $region5: #{tpu_custom_call.1} parent=1 // pred_fallthru
      _
    // Predicated region
    $region6: #{tpu_custom_call.1} parent=1 // pred_check
      _
    $region7: #{tpu_custom_call.1} parent=1 // pred_check_branch
      %16 = sbr.rel (0) target = $region9
    $region8: #{tpu_custom_call.1} parent=1 // pred_region
      _
    $region9: #{tpu_custom_call.1} parent=1 // pred_fallthru
      _
    // Predicated region
    $region10: #{tpu_custom_call.1} parent=1 // pred_check
      _
    $region11: #{tpu_custom_call.1} parent=1 // pred_check_branch
      %18 = sbr.rel (0) target = $region13
    $region12: #{tpu_custom_call.1} parent=1 // pred_region
      _
    $region13: #{tpu_custom_call.1} parent=1 // pred_fallthru
      _
    // Predicated region
    $region14: #{tpu_custom_call.1} parent=1 // pred_check
      _
    $region15: #{tpu_custom_call.1} parent=1 // pred_check_branch
      %20 = sbr.rel (0) target = $region17
    $region16: #{tpu_custom_call.1} parent=1 // pred_region
      _
    $region17: #{tpu_custom_call.1} parent=1 // pred_fallthru
      _
    // Predicated region
    $region18: #{tpu_custom_call.1} parent=1 // pred_check
      _
    $region19: #{tpu_custom_call.1} parent=1 // pred_check_branch
      %22 = sbr.rel (0) target = $region21
    $region20: #{tpu_custom_call.1} parent=1 // pred_region
      _
    $region21: #{tpu_custom_call.1} parent=1 // pred_fallthru
      _
    // Predicated region
    $region22: #{tpu_custom_call.1} parent=1 // pred_check
      _
    $region23: #{tpu_custom_call.1} parent=1 // pred_check_branch
      %24 = sbr.rel (0) target = $region25
    $region24: #{tpu_custom_call.1} parent=1 // pred_region
      _
    $region25: #{tpu_custom_call.1} parent=1 // pred_fallthru
      _
    // Predicated region
    $region26: #{tpu_custom_call.1} parent=1 // pred_check
      _
    $region27: #{tpu_custom_call.1} parent=1 // pred_check_branch
      %26 = sbr.rel (0) target = $region29
    $region28: #{tpu_custom_call.1} parent=1 // pred_region
      _
    $region29: #{tpu_custom_call.1} parent=1 // pred_fallthru
      _
    %v27 = vld [vmem:[%s0] sm:$0xff]
    %v28 = vld [vmem:[%s1] sm:$0xff]
    %v29 = vld [vmem:[%s1 + $0x8] sm:$0xff]
    %v30 = vld [vmem:[%s1 + $0x10] sm:$0xff]
    %v31 = vld [vmem:[%s1 + $0x18] sm:$0xff]
    %v32 = vld [vmem:[%s2] sm:$0x1]
    %v34 = vperm.slane %v32, 0
    %vm36 = vcmask 261120
    %v38 = vsel %vm36, %v27, 0
    %40 = vmatpush.msra.mxu0 0.0
    %41 = vmatpush.msra.mxu0 0.0
    %42 = vmatpush.msra.mxu0 0.0
    %43 = vmatpush.msra.mxu0 0.0
    %44 = vmatpush.msra.mxu0 0.0
    %45 = vmatpush.msra.mxu0 0.0
    %46 = vmatpush.msra.mxu0 0.0
    %47 = vmatpush.msra.mxu0 0.0
    %48 = vmatpush.msra.mxu0 0.0
    %49 = vmatpush.msra.mxu0 0.0
    %50 = vmatpush.msra.mxu0 0.0
    %51 = vmatpush.msra.mxu0 0.0
    %52 = vmatpush.msra.mxu0 %v31
    %53 = vmatpush.msra.mxu0 %v30
    %54 = vmatpush.msra.mxu0 %v29
    %55 = vmatpush.msra.mxu0 %v28
    %56 = vmatmul.f32.gmra.mxu0 %v38
    %v57 = vpop.f32.mrf.mxu0
    %v58 = vadd.f32 %v34, %v57
    %59 = vdwg.mxu0
    %v60 = vmax.f32 %v58, 0.0
    %v61 = vld [vmem:[%s3] sm:$0xff]
    %v62 = vld [vmem:[%s3 + $0x8] sm:$0xff]
    %v63 = vld [vmem:[%s4] sm:$0x1]
    %v65 = vperm.slane %v63, 0
    %vm67 = vcmask 130048
    %v69 = vsel %vm67, %v60, 0
    %71 = vmatpush.msra.mxu0 0.0
    %72 = vmatpush.msra.mxu0 0.0
    %73 = vmatpush.msra.mxu0 0.0
    %74 = vmatpush.msra.mxu0 0.0
    %75 = vmatpush.msra.mxu0 0.0
    %76 = vmatpush.msra.mxu0 0.0
    %77 = vmatpush.msra.mxu0 0.0
    %78 = vmatpush.msra.mxu0 0.0
    %79 = vmatpush.msra.mxu0 0.0
    %80 = vmatpush.msra.mxu0 0.0
    %81 = vmatpush.msra.mxu0 0.0
    %82 = vmatpush.msra.mxu0 0.0
    %83 = vmatpush.msra.mxu0 0.0
    %84 = vmatpush.msra.mxu0 0.0
    %85 = vmatpush.msra.mxu0 %v62
    %86 = vmatpush.msra.mxu0 %v61
    %87 = vmatmul.f32.gmra.mxu0 %v69
    %v88 = vpop.f32.mrf.mxu0
    %v89 = vadd.f32 %v65, %v88
    %90 = vdwg.mxu0
    %v91 = vmax.f32 %v89, 0.0
    %v92 = vld [vmem:[%s5] sm:$0xff]
    %v93 = vld [vmem:[%s6] sm:$0xff]
    %95 = vset.pattern.permute.xlu0 0
    %96 = vperm.xlu0 %95, %v93
    %v97 = vpop.permute.xlu0 %96
    %vm99 = vcmask 64512
    %v101 = vsel %vm99, %v92, 0
    %v104 = vsel %vm99, %v91, 0
    %106 = vmatpush.xpose.msra.mxu0 0.0
    %107 = vmatpush.xpose.msra.mxu0 0.0
    %108 = vmatpush.xpose.msra.mxu0 0.0
    %109 = vmatpush.xpose.msra.mxu0 0.0
    %110 = vmatpush.xpose.msra.mxu0 0.0
    %111 = vmatpush.xpose.msra.mxu0 0.0
    %112 = vmatpush.xpose.msra.mxu0 0.0
    %113 = vmatpush.xpose.msra.mxu0 0.0
    %114 = vmatpush.xpose.msra.mxu0 0.0
    %115 = vmatpush.xpose.msra.mxu0 0.0
    %116 = vmatpush.xpose.msra.mxu0 0.0
    %117 = vmatpush.xpose.msra.mxu0 0.0
    %118 = vmatpush.xpose.msra.mxu0 0.0
    %119 = vmatpush.xpose.msra.mxu0 0.0
    %120 = vmatpush.xpose.msra.mxu0 0.0
    %121 = vmatpush.xpose.msra.mxu0 %v104
    %122 = vmatmul.f32.gmra.mxu0 %v101
    %v123 = vpop.f32.mrf.mxu0
    %v124 = vadd.f32 %v97, %v123
    %125 = vdwg.mxu0
    %126 = vst.msk [vmem:[#allocation2] sm:$0xff] %vm99, %v124
    // Predicated region
    $region30: #{tpu_custom_call.1} parent=1 // pred_check
      _
    $region31: #{tpu_custom_call.1} parent=1 // pred_check_branch
      %128 = sbr.rel (0) target = $region33
    $region32: #{tpu_custom_call.1} parent=1 // pred_region
      %130 = vsyncadd [#allocation3], 0
      %s132 = sshll.u32 [#allocation2], 4
      %s133 = int_to_ptr.vmem [resolvable:$true] %s132
      %s134 = sshll.u32 %s7, 4
      %s135 = int_to_ptr.hbm [resolvable:$true] %s134
      %137 = dma.vmem_to_hbm [thread:$0]  %s133, 128, %s135, [#allocation3]
    $region33: #{tpu_custom_call.1} parent=1 // pred_fallthru
      _
    // Predicated region
    $region34: #{tpu_custom_call.1} parent=1 // pred_check
      _
    $region35: #{tpu_custom_call.1} parent=1 // pred_check_branch
      %139 = sbr.rel (0) target = $region37
    $region36: #{tpu_custom_call.1} parent=1 // pred_region
      %141 = dma.done [#allocation3], 128
    $region37: #{tpu_custom_call.1} parent=1 // pred_fallthru
      _
    %142 = vsyncpa [#allocation3], 1

// kernel: tpu_custom_call.1
$region0: #{tpu_custom_call.1}
  #allocation0 [shape = 'u32[]', space=smem, size = 0x4, offset = 0x4, fixed_abs, tag = 'smem constant byte address 0x4 - core index']
  #allocation1 [shape = 'u32[72,128]{1,0:T(1,128)}', space=vmem, size = 0x9000, scoped, tag = 'internal scratch']
  %s0 = inlined_call_operand.vmem [shape: f32[8,32], index: 0, kind: input, shape index: {}]
  %s1 = inlined_call_operand.vmem [shape: f32[32,16], index: 1, kind: input, shape index: {}]
  %s2 = inlined_call_operand.vmem [shape: f32[1,16], index: 2, kind: input, shape index: {}]
  %s3 = inlined_call_operand.vmem [shape: f32[16,8], index: 3, kind: input, shape index: {}]
  %s4 = inlined_call_operand.vmem [shape: f32[1,8], index: 4, kind: input, shape index: {}]
  %s5 = inlined_call_operand.vmem [shape: f32[8,8], index: 5, kind: input, shape index: {}]
  %s6 = inlined_call_operand.vmem [shape: f32[8,1], index: 6, kind: input, shape index: {}]
  %s7 = inlined_call_operand.hbm [shape: f32[8,8], index: 7, kind: output, shape index: {}]
  %s8 = sld [smem:[#allocation0]]
  $region38: #{tpu_custom_call.1} parent=0
    _
  %s10 = ssub.s32 1, %s8
  %s11 = scalar_select 0, %s10, %s8
  $region1: #{tpu_custom_call.1} parent=0
    #allocation2 [shape = 'u8[4096]{0}', space=vmem, size = 0x1000, scoped, tag = 'output window, operand 0, single buffered']
    #allocation3 [shape = 's32[1]{0}', space=sflag, size = 0x4, scoped, tag = 'scoped memory for tpu_custom_call.1']
    %12 = vsyncpa [#allocation3], 0
    // Predicated region
    $region2: #{tpu_custom_call.1} parent=1 // pred_check
      _
    $region3: #{tpu_custom_call.1} parent=1 // pred_check_branch
      %14 = sbr.rel (0) target = $region5
    $region4: #{tpu_custom_call.1} parent=1 // pred_region
      _
    $region5: #{tpu_custom_call.1} parent=1 // pred_fallthru
      _
    // Predicated region
    $region6: #{tpu_custom_call.1} parent=1 // pred_check
      _
    $region7: #{tpu_custom_call.1} parent=1 // pred_check_branch
      %16 = sbr.rel (0) target = $region9
    $region8: #{tpu_custom_call.1} parent=1 // pred_region
      _
    $region9: #{tpu_custom_call.1} parent=1 // pred_fallthru
      _
    // Predicated region
    $region10: #{tpu_custom_call.1} parent=1 // pred_check
      _
    $region11: #{tpu_custom_call.1} parent=1 // pred_check_branch
      %18 = sbr.rel (0) target = $region13
    $region12: #{tpu_custom_call.1} parent=1 // pred_region
      _
    $region13: #{tpu_custom_call.1} parent=1 // pred_fallthru
      _
    // Predicated region
    $region14: #{tpu_custom_call.1} parent=1 // pred_check
      _
    $region15: #{tpu_custom_call.1} parent=1 // pred_check_branch
      %20 = sbr.rel (0) target = $region17
    $region16: #{tpu_custom_call.1} parent=1 // pred_region
      _
    $region17: #{tpu_custom_call.1} parent=1 // pred_fallthru
      _
    // Predicated region
    $region18: #{tpu_custom_call.1} parent=1 // pred_check
      _
    $region19: #{tpu_custom_call.1} parent=1 // pred_check_branch
      %22 = sbr.rel (0) target = $region21
    $region20: #{tpu_custom_call.1} parent=1 // pred_region
      _
    $region21: #{tpu_custom_call.1} parent=1 // pred_fallthru
      _
    // Predicated region
    $region22: #{tpu_custom_call.1} parent=1 // pred_check
      _
    $region23: #{tpu_custom_call.1} parent=1 // pred_check_branch
      %24 = sbr.rel (0) target = $region25
    $region24: #{tpu_custom_call.1} parent=1 // pred_region
      _
    $region25: #{tpu_custom_call.1} parent=1 // pred_fallthru
      _
    // Predicated region
    $region26: #{tpu_custom_call.1} parent=1 // pred_check
      _
    $region27: #{tpu_custom_call.1} parent=1 // pred_check_branch
      %26 = sbr.rel (0) target = $region29
    $region28: #{tpu_custom_call.1} parent=1 // pred_region
      _
    $region29: #{tpu_custom_call.1} parent=1 // pred_fallthru
      _
    %v27 = vld [vmem:[%s0] sm:$0xff]
    %v28 = vld [vmem:[%s1] sm:$0xff]
    %v29 = vld [vmem:[%s1 + $0x8] sm:$0xff]
    %v30 = vld [vmem:[%s1 + $0x10] sm:$0xff]
    %v31 = vld [vmem:[%s1 + $0x18] sm:$0xff]
    %v32 = vld [vmem:[%s2] sm:$0x1]
    %v34 = vperm.slane %v32, 0
    %vm36 = vcmask 261120
    %v38 = vsel %vm36, %v27, 0
    %40 = vmatpush.msra.mxu0 0.0
    %41 = vmatpush.msra.mxu0 0.0
    %42 = vmatpush.msra.mxu0 0.0
    %43 = vmatpush.msra.mxu0 0.0
    %44 = vmatpush.msra.mxu0 0.0
    %45 = vmatpush.msra.mxu0 0.0
    %46 = vmatpush.msra.mxu0 0.0
    %47 = vmatpush.msra.mxu0 0.0
    %48 = vmatpush.msra.mxu0 0.0
    %49 = vmatpush.msra.mxu0 0.0
    %50 = vmatpush.msra.mxu0 0.0
    %51 = vmatpush.msra.mxu0 0.0
    %52 = vmatpush.msra.mxu0 %v31
    %53 = vmatpush.msra.mxu0 %v30
    %54 = vmatpush.msra.mxu0 %v29
    %55 = vmatpush.msra.mxu0 %v28
    %56 = vmatmul.f32.gmra.mxu0 %v38
    %v57 = vpop.f32.mrf.mxu0
    %v58 = vadd.f32 %v34, %v57
    %59 = vdwg.mxu0
    %v60 = vmax.f32 %v58, 0.0
    %v61 = vld [vmem:[%s3] sm:$0xff]
    %v62 = vld [vmem:[%s3 + $0x8] sm:$0xff]
    %v63 = vld [vmem:[%s4] sm:$0x1]
    %v65 = vperm.slane %v63, 0
    %vm67 = vcmask 130048
    %v69 = vsel %vm67, %v60, 0
    %71 = vmatpush.msra.mxu0 0.0
    %72 = vmatpush.msra.mxu0 0.0
    %73 = vmatpush.msra.mxu0 0.0
    %74 = vmatpush.msra.mxu0 0.0
    %75 = vmatpush.msra.mxu0 0.0
    %76 = vmatpush.msra.mxu0 0.0
    %77 = vmatpush.msra.mxu0 0.0
    %78 = vmatpush.msra.mxu0 0.0
    %79 = vmatpush.msra.mxu0 0.0
    %80 = vmatpush.msra.mxu0 0.0
    %81 = vmatpush.msra.mxu0 0.0
    %82 = vmatpush.msra.mxu0 0.0
    %83 = vmatpush.msra.mxu0 0.0
    %84 = vmatpush.msra.mxu0 0.0
    %85 = vmatpush.msra.mxu0 %v62
    %86 = vmatpush.msra.mxu0 %v61
    %87 = vmatmul.f32.gmra.mxu0 %v69
    %v88 = vpop.f32.mrf.mxu0
    %v89 = vadd.f32 %v65, %v88
    %90 = vdwg.mxu0
    %v91 = vmax.f32 %v89, 0.0
    %v92 = vld [vmem:[%s5] sm:$0xff]
    %v93 = vld [vmem:[%s6] sm:$0xff]
    %95 = vset.pattern.permute.xlu0 0
    %96 = vperm.xlu0 %95, %v93
    %v97 = vpop.permute.xlu0 %96
    %vm99 = vcmask 64512
    %v101 = vsel %vm99, %v92, 0
    %v104 = vsel %vm99, %v91, 0
    %106 = vmatpush.xpose.msra.mxu0 0.0
    %107 = vmatpush.xpose.msra.mxu0 0.0
    %108 = vmatpush.xpose.msra.mxu0 0.0
    %109 = vmatpush.xpose.msra.mxu0 0.0
    %110 = vmatpush.xpose.msra.mxu0 0.0
    %111 = vmatpush.xpose.msra.mxu0 0.0
    %112 = vmatpush.xpose.msra.mxu0 0.0
    %113 = vmatpush.xpose.msra.mxu0 0.0
    %114 = vmatpush.xpose.msra.mxu0 0.0
    %115 = vmatpush.xpose.msra.mxu0 0.0
    %116 = vmatpush.xpose.msra.mxu0 0.0
    %117 = vmatpush.xpose.msra.mxu0 0.0
    %118 = vmatpush.xpose.msra.mxu0 0.0
    %119 = vmatpush.xpose.msra.mxu0 0.0
    %120 = vmatpush.xpose.msra.mxu0 0.0
    %121 = vmatpush.xpose.msra.mxu0 %v104
    %122 = vmatmul.f32.gmra.mxu0 %v101
    %v123 = vpop.f32.mrf.mxu0
    %v124 = vadd.f32 %v97, %v123
    %125 = vdwg.mxu0
    %126 = vst.msk [vmem:[#allocation2] sm:$0xff] %vm99, %v124
    // Predicated region
    $region30: #{tpu_custom_call.1} parent=1 // pred_check
      _
    $region31: #{tpu_custom_call.1} parent=1 // pred_check_branch
      %128 = sbr.rel (0) target = $region33
    $region32: #{tpu_custom_call.1} parent=1 // pred_region
      %130 = vsyncadd [#allocation3], 0
      %s132 = sshll.u32 [#allocation2], 4
      %s133 = int_to_ptr.vmem [resolvable:$true] %s132
      %s134 = sshll.u32 %s7, 4
      %s135 = int_to_ptr.hbm [resolvable:$true] %s134
      %137 = dma.vmem_to_hbm [thread:$0]  %s133, 128, %s135, [#allocation3]
    $region33: #{tpu_custom_call.1} parent=1 // pred_fallthru
      _
    // Predicated region
    $region34: #{tpu_custom_call.1} parent=1 // pred_check
      _
    $region35: #{tpu_custom_call.1} parent=1 // pred_check_branch
      %139 = sbr.rel (0) target = $region37
    $region36: #{tpu_custom_call.1} parent=1 // pred_region
      %141 = dma.done [#allocation3], 128
    $region37: #{tpu_custom_call.1} parent=1 // pred_fallthru
      _
    %142 = vsyncpa [#allocation3], 1

</llo_original>
